<compile_context>
chip_gen: v5e
topology: v5e:2x2
jax: 0.10.0
libtpu: 0.0.40
codegen_flags: <defaults>
</compile_context>

<pallas_src>
import numpy as np
import jax
import jax.numpy as jnp
from jax.experimental import pallas as pl
from jax.experimental.pallas import tpu as pltpu

H = 20        # true hidden size
N_OUT = 10    # fc output size
HP = 128      # hidden padded to lane width
OP = 128      # fc output padded to lane width


def deep_rnn_kernel(x_ref, wih0_ref, b0_ref, whh0t_ref,
                    wih1t_ref, b1_ref, whh1t_ref,
                    wfct_ref, bfc_ref,
                    out_ref, seq_scr):
    f32 = jnp.float32
    BP = out_ref.shape[0]
    TB = x_ref.shape[0]          # T * BP (time-major, flattened)
    T = TB // BP

    # ---- Phase 1: layer-0 input projection + combined bias for ALL timesteps.
    # (T*BP, 1) * (1, HP) + (1, HP) -> (T*BP, HP); one vectorized pass.
    seq_scr[...] = x_ref[...] * wih0_ref[...] + b0_ref[...]

    # ---- Phase 2: layer-0 recurrence (fully unrolled; T static).
    whh0t = whh0t_ref[...]                       # hoisted loop-invariant load
    h0 = jnp.zeros((BP, HP), f32)
    for t in range(T):
        off = t * BP                             # static offset
        pre0 = seq_scr[pl.ds(off, BP), :] + jnp.dot(
            h0, whh0t, preferred_element_type=f32)
        h0 = jnp.tanh(pre0)
        seq_scr[pl.ds(off, BP), :] = h0          # store h0_t sequence in place

    # ---- Phase 3: layer-1 input projection for all T as ONE batched matmul.
    seq_scr[...] = jnp.dot(seq_scr[...], wih1t_ref[...],
                           preferred_element_type=f32) + b1_ref[...]

    # ---- Phase 4: layer-1 recurrence (fully unrolled); one dot + tanh per step.
    whh1t = whh1t_ref[...]                       # hoisted loop-invariant load
    h1 = jnp.zeros((BP, HP), f32)
    for t in range(T):
        off = t * BP
        pre1 = seq_scr[pl.ds(off, BP), :] + jnp.dot(
            h1, whh1t, preferred_element_type=f32)
        h1 = jnp.tanh(pre1)

    # ---- Phase 5: fc on the last time step of the top layer.
    out_ref[...] = jnp.dot(h1, wfct_ref[...],
                           preferred_element_type=f32) + bfc_ref[...]


def deep_rnn_forward(x, params):
    """x: (B, T, 1) float32 (batch_first, like the PyTorch module). Returns (B, n_out)."""
    B, T, _ = x.shape
    BP = max(8, ((B + 7) // 8) * 8)
    f32 = jnp.float32

    # Time-major, batch-padded, flattened to (T*BP, 1) so the kernel indexes
    # static (BP, HP) row-slabs without reshapes.
    x_tm = jnp.transpose(x, (1, 0, 2)).astype(f32)                       # (T, B, 1)
    x_flat = (jnp.zeros((T, BP, 1), f32).at[:, :B, :].set(x_tm)
              .reshape(T * BP, 1))

    # Zero-padded, pre-transposed weights (lanes = output hidden dim).
    wih0 = jnp.zeros((1, HP), f32).at[0, :H].set(params["w_ih_l0"][:, 0])
    b0 = jnp.zeros((1, HP), f32).at[0, :H].set(params["b_ih_l0"] + params["b_hh_l0"])
    whh0t = jnp.zeros((HP, HP), f32).at[:H, :H].set(params["w_hh_l0"].T)

    wih1t = jnp.zeros((HP, HP), f32).at[:H, :H].set(params["w_ih_l1"].T)
    b1 = jnp.zeros((1, HP), f32).at[0, :H].set(params["b_ih_l1"] + params["b_hh_l1"])
    whh1t = jnp.zeros((HP, HP), f32).at[:H, :H].set(params["w_hh_l1"].T)

    wfct = jnp.zeros((HP, OP), f32).at[:H, :N_OUT].set(params["w_fc"].T)
    bfc = jnp.zeros((1, OP), f32).at[0, :N_OUT].set(params["b_fc"])

    # Gridless single invocation: whole arrays land in VMEM once, no pipeline
    # prologue/epilogue or pointless double-buffering for a one-step kernel.
    out_padded = pl.pallas_call(
        deep_rnn_kernel,
        out_shape=jax.ShapeDtypeStruct((BP, OP), f32),
        scratch_shapes=[pltpu.VMEM((T * BP, HP), f32)],   # h0 / proj1 sequence (32 KB)
    )(x_flat, wih0, b0, whh0t, wih1t, b1, whh1t, wfct, bfc)

    return out_padded[:B, :N_OUT]


def reference_forward(x, p):
    """Pure-JAX reference matching torch.nn.RNN(num_layers=2, batch_first=True) + Linear."""
    B, T, _ = x.shape
    h0 = jnp.zeros((B, H), jnp.float32)
    h1 = jnp.zeros((B, H), jnp.float32)
    for t in range(T):
        xt = x[:, t, :]
        h0 = jnp.tanh(xt @ p["w_ih_l0"].T + p["b_ih_l0"] + h0 @ p["w_hh_l0"].T + p["b_hh_l0"])
        h1 = jnp.tanh(h0 @ p["w_ih_l1"].T + p["b_ih_l1"] + h1 @ p["w_hh_l1"].T + p["b_hh_l1"])
    return h1 @ p["w_fc"].T + p["b_fc"]


def init_params(key):
    """Deterministic init mimicking PyTorch's uniform(-1/sqrt(H), 1/sqrt(H))."""
    bound = 1.0 / np.sqrt(H)
    shapes = {
        "w_ih_l0": (H, 1), "w_hh_l0": (H, H), "b_ih_l0": (H,), "b_hh_l0": (H,),
        "w_ih_l1": (H, H), "w_hh_l1": (H, H), "b_ih_l1": (H,), "b_hh_l1": (H,),
        "w_fc": (N_OUT, H), "b_fc": (N_OUT,),
    }
    params = {}
    keys = jax.random.split(key, len(shapes))
    for k, (name, shape) in zip(keys, shapes.items()):
        params[name] = jax.random.uniform(k, shape, jnp.float32, -bound, bound)
    return params


if __name__ == "__main__":
    key = jax.random.PRNGKey(0)
    pkey, xkey = jax.random.split(key)
    params = init_params(pkey)

    B, T = 2, 8
    x = jax.random.normal(xkey, (B, T, 1), jnp.float32)   # (batch, seq, input_size=1)

    out = deep_rnn_forward(x, params)
    out = jax.block_until_ready(out)

    ref = reference_forward(x, params)
    np.testing.assert_allclose(np.asarray(out), np.asarray(ref), rtol=1e-4, atol=1e-4)

    assert out.shape == (B, N_OUT)
    print("KERNEL_OK")
</pallas_src>

<mosaic_0001>
module attributes {stable_mosaic.version = 11 : i64} {
  func.func @deep_rnn_kernel(%arg0: memref<64x1xf32, #tpu.memory_space<vmem>>, %arg1: memref<1x128xf32, #tpu.memory_space<vmem>>, %arg2: memref<1x128xf32, #tpu.memory_space<vmem>>, %arg3: memref<128x128xf32, #tpu.memory_space<vmem>>, %arg4: memref<128x128xf32, #tpu.memory_space<vmem>>, %arg5: memref<1x128xf32, #tpu.memory_space<vmem>>, %arg6: memref<128x128xf32, #tpu.memory_space<vmem>>, %arg7: memref<128x128xf32, #tpu.memory_space<vmem>>, %arg8: memref<1x128xf32, #tpu.memory_space<vmem>>, %arg9: memref<8x128xf32, #tpu.memory_space<vmem>>, %arg10: memref<64x128xf32, #tpu.memory_space<vmem>>) attributes {dimension_semantics = [], scalar_prefetch = 0 : i64, scratch_operands = 1 : i64, tpu.core_type = #tpu.core_type<tc>} {
    %c0 = arith.constant 0 : index
    %c0_0 = arith.constant 0 : index
    %0 = vector.load %arg0[%c0, %c0_0] : memref<64x1xf32, #tpu.memory_space<vmem>>, vector<64x1xf32>
    %c0_1 = arith.constant 0 : index
    %c0_2 = arith.constant 0 : index
    %1 = vector.load %arg1[%c0_1, %c0_2] : memref<1x128xf32, #tpu.memory_space<vmem>>, vector<1x128xf32>
    %2 = vector.broadcast %0 : vector<64x1xf32> to vector<64x128xf32>
    %3 = vector.broadcast %1 : vector<1x128xf32> to vector<64x128xf32>
    %4 = arith.mulf %2, %3 : vector<64x128xf32>
    %c0_3 = arith.constant 0 : index
    %c0_4 = arith.constant 0 : index
    %5 = vector.load %arg2[%c0_3, %c0_4] : memref<1x128xf32, #tpu.memory_space<vmem>>, vector<1x128xf32>
    %6 = vector.broadcast %5 : vector<1x128xf32> to vector<64x128xf32>
    %7 = arith.addf %4, %6 : vector<64x128xf32>
    %c0_5 = arith.constant 0 : index
    %c0_6 = arith.constant 0 : index
    %8 = vector.load %arg10[%c0_5, %c0_6] : memref<64x128xf32, #tpu.memory_space<vmem>>, vector<64x128xf32>
    tpu.vector_store %arg10[%c0_5, %c0_6], %7 {strides = array<i32>} : memref<64x128xf32, #tpu.memory_space<vmem>>, vector<64x128xf32>,
    %c0_7 = arith.constant 0 : index
    %c0_8 = arith.constant 0 : index
    %9 = vector.load %arg3[%c0_7, %c0_8] : memref<128x128xf32, #tpu.memory_space<vmem>>, vector<128x128xf32>
    %cst = arith.constant 0.000000e+00 : f32
    %10 = vector.broadcast %cst : f32 to vector<8x128xf32>
    %c0_9 = arith.constant 0 : index
    %c0_10 = arith.constant 0 : index
    %11 = vector.load %arg10[%c0_9, %c0_10] : memref<64x128xf32, #tpu.memory_space<vmem>>, vector<8x128xf32>
    %cst_11 = arith.constant dense<0.000000e+00> : vector<8x128xf32>
    %12 = tpu.matmul %10, %9, %cst_11 {dimension_numbers = #tpu.dot_dimension_numbers<[1], [0], [0], [1], [0, 0, 1, 1], [], []>} : vector<8x128xf32>, vector<128x128xf32>, vector<8x128xf32> -> vector<8x128xf32>
    %13 = arith.addf %11, %12 : vector<8x128xf32>
    %14 = math.tanh %13 : vector<8x128xf32>
    %c0_12 = arith.constant 0 : index
    %c0_13 = arith.constant 0 : index
    %15 = vector.load %arg10[%c0_12, %c0_13] : memref<64x128xf32, #tpu.memory_space<vmem>>, vector<8x128xf32>
    tpu.vector_store %arg10[%c0_12, %c0_13], %14 {strides = array<i32>} : memref<64x128xf32, #tpu.memory_space<vmem>>, vector<8x128xf32>,
    %c8 = arith.constant 8 : index
    %c0_14 = arith.constant 0 : index
    %16 = vector.load %arg10[%c8, %c0_14] : memref<64x128xf32, #tpu.memory_space<vmem>>, vector<8x128xf32>
    %cst_15 = arith.constant dense<0.000000e+00> : vector<8x128xf32>
    %17 = tpu.matmul %14, %9, %cst_15 {dimension_numbers = #tpu.dot_dimension_numbers<[1], [0], [0], [1], [0, 0, 1, 1], [], []>} : vector<8x128xf32>, vector<128x128xf32>, vector<8x128xf32> -> vector<8x128xf32>
    %18 = arith.addf %16, %17 : vector<8x128xf32>
    %19 = math.tanh %18 : vector<8x128xf32>
    %c8_16 = arith.constant 8 : index
    %c0_17 = arith.constant 0 : index
    %20 = vector.load %arg10[%c8_16, %c0_17] : memref<64x128xf32, #tpu.memory_space<vmem>>, vector<8x128xf32>
    tpu.vector_store %arg10[%c8_16, %c0_17], %19 {strides = array<i32>} : memref<64x128xf32, #tpu.memory_space<vmem>>, vector<8x128xf32>,
    %c16 = arith.constant 16 : index
    %c0_18 = arith.constant 0 : index
    %21 = vector.load %arg10[%c16, %c0_18] : memref<64x128xf32, #tpu.memory_space<vmem>>, vector<8x128xf32>
    %cst_19 = arith.constant dense<0.000000e+00> : vector<8x128xf32>
    %22 = tpu.matmul %19, %9, %cst_19 {dimension_numbers = #tpu.dot_dimension_numbers<[1], [0], [0], [1], [0, 0, 1, 1], [], []>} : vector<8x128xf32>, vector<128x128xf32>, vector<8x128xf32> -> vector<8x128xf32>
    %23 = arith.addf %21, %22 : vector<8x128xf32>
    %24 = math.tanh %23 : vector<8x128xf32>
    %c16_20 = arith.constant 16 : index
    %c0_21 = arith.constant 0 : index
    %25 = vector.load %arg10[%c16_20, %c0_21] : memref<64x128xf32, #tpu.memory_space<vmem>>, vector<8x128xf32>
    tpu.vector_store %arg10[%c16_20, %c0_21], %24 {strides = array<i32>} : memref<64x128xf32, #tpu.memory_space<vmem>>, vector<8x128xf32>,
    %c24 = arith.constant 24 : index
    %c0_22 = arith.constant 0 : index
    %26 = vector.load %arg10[%c24, %c0_22] : memref<64x128xf32, #tpu.memory_space<vmem>>, vector<8x128xf32>
    %cst_23 = arith.constant dense<0.000000e+00> : vector<8x128xf32>
    %27 = tpu.matmul %24, %9, %cst_23 {dimension_numbers = #tpu.dot_dimension_numbers<[1], [0], [0], [1], [0, 0, 1, 1], [], []>} : vector<8x128xf32>, vector<128x128xf32>, vector<8x128xf32> -> vector<8x128xf32>
    %28 = arith.addf %26, %27 : vector<8x128xf32>
    %29 = math.tanh %28 : vector<8x128xf32>
    %c24_24 = arith.constant 24 : index
    %c0_25 = arith.constant 0 : index
    %30 = vector.load %arg10[%c24_24, %c0_25] : memref<64x128xf32, #tpu.memory_space<vmem>>, vector<8x128xf32>
    tpu.vector_store %arg10[%c24_24, %c0_25], %29 {strides = array<i32>} : memref<64x128xf32, #tpu.memory_space<vmem>>, vector<8x128xf32>,
    %c32 = arith.constant 32 : index
    %c0_26 = arith.constant 0 : index
    %31 = vector.load %arg10[%c32, %c0_26] : memref<64x128xf32, #tpu.memory_space<vmem>>, vector<8x128xf32>
    %cst_27 = arith.constant dense<0.000000e+00> : vector<8x128xf32>
    %32 = tpu.matmul %29, %9, %cst_27 {dimension_numbers = #tpu.dot_dimension_numbers<[1], [0], [0], [1], [0, 0, 1, 1], [], []>} : vector<8x128xf32>, vector<128x128xf32>, vector<8x128xf32> -> vector<8x128xf32>
    %33 = arith.addf %31, %32 : vector<8x128xf32>
    %34 = math.tanh %33 : vector<8x128xf32>
    %c32_28 = arith.constant 32 : index
    %c0_29 = arith.constant 0 : index
    %35 = vector.load %arg10[%c32_28, %c0_29] : memref<64x128xf32, #tpu.memory_space<vmem>>, vector<8x128xf32>
    tpu.vector_store %arg10[%c32_28, %c0_29], %34 {strides = array<i32>} : memref<64x128xf32, #tpu.memory_space<vmem>>, vector<8x128xf32>,
    %c40 = arith.constant 40 : index
    %c0_30 = arith.constant 0 : index
    %36 = vector.load %arg10[%c40, %c0_30] : memref<64x128xf32, #tpu.memory_space<vmem>>, vector<8x128xf32>
    %cst_31 = arith.constant dense<0.000000e+00> : vector<8x128xf32>
    %37 = tpu.matmul %34, %9, %cst_31 {dimension_numbers = #tpu.dot_dimension_numbers<[1], [0], [0], [1], [0, 0, 1, 1], [], []>} : vector<8x128xf32>, vector<128x128xf32>, vector<8x128xf32> -> vector<8x128xf32>
    %38 = arith.addf %36, %37 : vector<8x128xf32>
    %39 = math.tanh %38 : vector<8x128xf32>
    %c40_32 = arith.constant 40 : index
    %c0_33 = arith.constant 0 : index
    %40 = vector.load %arg10[%c40_32, %c0_33] : memref<64x128xf32, #tpu.memory_space<vmem>>, vector<8x128xf32>
    tpu.vector_store %arg10[%c40_32, %c0_33], %39 {strides = array<i32>} : memref<64x128xf32, #tpu.memory_space<vmem>>, vector<8x128xf32>,
    %c48 = arith.constant 48 : index
    %c0_34 = arith.constant 0 : index
    %41 = vector.load %arg10[%c48, %c0_34] : memref<64x128xf32, #tpu.memory_space<vmem>>, vector<8x128xf32>
    %cst_35 = arith.constant dense<0.000000e+00> : vector<8x128xf32>
    %42 = tpu.matmul %39, %9, %cst_35 {dimension_numbers = #tpu.dot_dimension_numbers<[1], [0], [0], [1], [0, 0, 1, 1], [], []>} : vector<8x128xf32>, vector<128x128xf32>, vector<8x128xf32> -> vector<8x128xf32>
    %43 = arith.addf %41, %42 : vector<8x128xf32>
    %44 = math.tanh %43 : vector<8x128xf32>
    %c48_36 = arith.constant 48 : index
    %c0_37 = arith.constant 0 : index
    %45 = vector.load %arg10[%c48_36, %c0_37] : memref<64x128xf32, #tpu.memory_space<vmem>>, vector<8x128xf32>
    tpu.vector_store %arg10[%c48_36, %c0_37], %44 {strides = array<i32>} : memref<64x128xf32, #tpu.memory_space<vmem>>, vector<8x128xf32>,
    %c56 = arith.constant 56 : index
    %c0_38 = arith.constant 0 : index
    %46 = vector.load %arg10[%c56, %c0_38] : memref<64x128xf32, #tpu.memory_space<vmem>>, vector<8x128xf32>
    %cst_39 = arith.constant dense<0.000000e+00> : vector<8x128xf32>
    %47 = tpu.matmul %44, %9, %cst_39 {dimension_numbers = #tpu.dot_dimension_numbers<[1], [0], [0], [1], [0, 0, 1, 1], [], []>} : vector<8x128xf32>, vector<128x128xf32>, vector<8x128xf32> -> vector<8x128xf32>
    %48 = arith.addf %46, %47 : vector<8x128xf32>
    %49 = math.tanh %48 : vector<8x128xf32>
    %c56_40 = arith.constant 56 : index
    %c0_41 = arith.constant 0 : index
    %50 = vector.load %arg10[%c56_40, %c0_41] : memref<64x128xf32, #tpu.memory_space<vmem>>, vector<8x128xf32>
    tpu.vector_store %arg10[%c56_40, %c0_41], %49 {strides = array<i32>} : memref<64x128xf32, #tpu.memory_space<vmem>>, vector<8x128xf32>,
    %c0_42 = arith.constant 0 : index
    %c0_43 = arith.constant 0 : index
    %51 = vector.load %arg10[%c0_42, %c0_43] : memref<64x128xf32, #tpu.memory_space<vmem>>, vector<64x128xf32>
    %c0_44 = arith.constant 0 : index
    %c0_45 = arith.constant 0 : index
    %52 = vector.load %arg4[%c0_44, %c0_45] : memref<128x128xf32, #tpu.memory_space<vmem>>, vector<128x128xf32>
    %cst_46 = arith.constant dense<0.000000e+00> : vector<64x128xf32>
    %53 = tpu.matmul %51, %52, %cst_46 {dimension_numbers = #tpu.dot_dimension_numbers<[1], [0], [0], [1], [0, 0, 1, 1], [], []>} : vector<64x128xf32>, vector<128x128xf32>, vector<64x128xf32> -> vector<64x128xf32>
    %c0_47 = arith.constant 0 : index
    %c0_48 = arith.constant 0 : index
    %54 = vector.load %arg5[%c0_47, %c0_48] : memref<1x128xf32, #tpu.memory_space<vmem>>, vector<1x128xf32>
    %55 = vector.broadcast %54 : vector<1x128xf32> to vector<64x128xf32>
    %56 = arith.addf %53, %55 : vector<64x128xf32>
    %c0_49 = arith.constant 0 : index
    %c0_50 = arith.constant 0 : index
    %57 = vector.load %arg10[%c0_49, %c0_50] : memref<64x128xf32, #tpu.memory_space<vmem>>, vector<64x128xf32>
    tpu.vector_store %arg10[%c0_49, %c0_50], %56 {strides = array<i32>} : memref<64x128xf32, #tpu.memory_space<vmem>>, vector<64x128xf32>,
    %c0_51 = arith.constant 0 : index
    %c0_52 = arith.constant 0 : index
    %58 = vector.load %arg6[%c0_51, %c0_52] : memref<128x128xf32, #tpu.memory_space<vmem>>, vector<128x128xf32>
    %cst_53 = arith.constant 0.000000e+00 : f32
    %59 = vector.broadcast %cst_53 : f32 to vector<8x128xf32>
    %c0_54 = arith.constant 0 : index
    %c0_55 = arith.constant 0 : index
    %60 = vector.load %arg10[%c0_54, %c0_55] : memref<64x128xf32, #tpu.memory_space<vmem>>, vector<8x128xf32>
    %cst_56 = arith.constant dense<0.000000e+00> : vector<8x128xf32>
    %61 = tpu.matmul %59, %58, %cst_56 {dimension_numbers = #tpu.dot_dimension_numbers<[1], [0], [0], [1], [0, 0, 1, 1], [], []>} : vector<8x128xf32>, vector<128x128xf32>, vector<8x128xf32> -> vector<8x128xf32>
    %62 = arith.addf %60, %61 : vector<8x128xf32>
    %63 = math.tanh %62 : vector<8x128xf32>
    %c8_57 = arith.constant 8 : index
    %c0_58 = arith.constant 0 : index
    %64 = vector.load %arg10[%c8_57, %c0_58] : memref<64x128xf32, #tpu.memory_space<vmem>>, vector<8x128xf32>
    %cst_59 = arith.constant dense<0.000000e+00> : vector<8x128xf32>
    %65 = tpu.matmul %63, %58, %cst_59 {dimension_numbers = #tpu.dot_dimension_numbers<[1], [0], [0], [1], [0, 0, 1, 1], [], []>} : vector<8x128xf32>, vector<128x128xf32>, vector<8x128xf32> -> vector<8x128xf32>
    %66 = arith.addf %64, %65 : vector<8x128xf32>
    %67 = math.tanh %66 : vector<8x128xf32>
    %c16_60 = arith.constant 16 : index
    %c0_61 = arith.constant 0 : index
    %68 = vector.load %arg10[%c16_60, %c0_61] : memref<64x128xf32, #tpu.memory_space<vmem>>, vector<8x128xf32>
    %cst_62 = arith.constant dense<0.000000e+00> : vector<8x128xf32>
    %69 = tpu.matmul %67, %58, %cst_62 {dimension_numbers = #tpu.dot_dimension_numbers<[1], [0], [0], [1], [0, 0, 1, 1], [], []>} : vector<8x128xf32>, vector<128x128xf32>, vector<8x128xf32> -> vector<8x128xf32>
    %70 = arith.addf %68, %69 : vector<8x128xf32>
    %71 = math.tanh %70 : vector<8x128xf32>
    %c24_63 = arith.constant 24 : index
    %c0_64 = arith.constant 0 : index
    %72 = vector.load %arg10[%c24_63, %c0_64] : memref<64x128xf32, #tpu.memory_space<vmem>>, vector<8x128xf32>
    %cst_65 = arith.constant dense<0.000000e+00> : vector<8x128xf32>
    %73 = tpu.matmul %71, %58, %cst_65 {dimension_numbers = #tpu.dot_dimension_numbers<[1], [0], [0], [1], [0, 0, 1, 1], [], []>} : vector<8x128xf32>, vector<128x128xf32>, vector<8x128xf32> -> vector<8x128xf32>
    %74 = arith.addf %72, %73 : vector<8x128xf32>
    %75 = math.tanh %74 : vector<8x128xf32>
    %c32_66 = arith.constant 32 : index
    %c0_67 = arith.constant 0 : index
    %76 = vector.load %arg10[%c32_66, %c0_67] : memref<64x128xf32, #tpu.memory_space<vmem>>, vector<8x128xf32>
    %cst_68 = arith.constant dense<0.000000e+00> : vector<8x128xf32>
    %77 = tpu.matmul %75, %58, %cst_68 {dimension_numbers = #tpu.dot_dimension_numbers<[1], [0], [0], [1], [0, 0, 1, 1], [], []>} : vector<8x128xf32>, vector<128x128xf32>, vector<8x128xf32> -> vector<8x128xf32>
    %78 = arith.addf %76, %77 : vector<8x128xf32>
    %79 = math.tanh %78 : vector<8x128xf32>
    %c40_69 = arith.constant 40 : index
    %c0_70 = arith.constant 0 : index
    %80 = vector.load %arg10[%c40_69, %c0_70] : memref<64x128xf32, #tpu.memory_space<vmem>>, vector<8x128xf32>
    %cst_71 = arith.constant dense<0.000000e+00> : vector<8x128xf32>
    %81 = tpu.matmul %79, %58, %cst_71 {dimension_numbers = #tpu.dot_dimension_numbers<[1], [0], [0], [1], [0, 0, 1, 1], [], []>} : vector<8x128xf32>, vector<128x128xf32>, vector<8x128xf32> -> vector<8x128xf32>
    %82 = arith.addf %80, %81 : vector<8x128xf32>
    %83 = math.tanh %82 : vector<8x128xf32>
    %c48_72 = arith.constant 48 : index
    %c0_73 = arith.constant 0 : index
    %84 = vector.load %arg10[%c48_72, %c0_73] : memref<64x128xf32, #tpu.memory_space<vmem>>, vector<8x128xf32>
    %cst_74 = arith.constant dense<0.000000e+00> : vector<8x128xf32>
    %85 = tpu.matmul %83, %58, %cst_74 {dimension_numbers = #tpu.dot_dimension_numbers<[1], [0], [0], [1], [0, 0, 1, 1], [], []>} : vector<8x128xf32>, vector<128x128xf32>, vector<8x128xf32> -> vector<8x128xf32>
    %86 = arith.addf %84, %85 : vector<8x128xf32>
    %87 = math.tanh %86 : vector<8x128xf32>
    %c56_75 = arith.constant 56 : index
    %c0_76 = arith.constant 0 : index
    %88 = vector.load %arg10[%c56_75, %c0_76] : memref<64x128xf32, #tpu.memory_space<vmem>>, vector<8x128xf32>
    %cst_77 = arith.constant dense<0.000000e+00> : vector<8x128xf32>
    %89 = tpu.matmul %87, %58, %cst_77 {dimension_numbers = #tpu.dot_dimension_numbers<[1], [0], [0], [1], [0, 0, 1, 1], [], []>} : vector<8x128xf32>, vector<128x128xf32>, vector<8x128xf32> -> vector<8x128xf32>
    %90 = arith.addf %88, %89 : vector<8x128xf32>
    %91 = math.tanh %90 : vector<8x128xf32>
    %c0_78 = arith.constant 0 : index
    %c0_79 = arith.constant 0 : index
    %92 = vector.load %arg7[%c0_78, %c0_79] : memref<128x128xf32, #tpu.memory_space<vmem>>, vector<128x128xf32>
    %cst_80 = arith.constant dense<0.000000e+00> : vector<8x128xf32>
    %93 = tpu.matmul %91, %92, %cst_80 {dimension_numbers = #tpu.dot_dimension_numbers<[1], [0], [0], [1], [0, 0, 1, 1], [], []>} : vector<8x128xf32>, vector<128x128xf32>, vector<8x128xf32> -> vector<8x128xf32>
    %c0_81 = arith.constant 0 : index
    %c0_82 = arith.constant 0 : index
    %94 = vector.load %arg8[%c0_81, %c0_82] : memref<1x128xf32, #tpu.memory_space<vmem>>, vector<1x128xf32>
    %95 = vector.broadcast %94 : vector<1x128xf32> to vector<8x128xf32>
    %96 = arith.addf %93, %95 : vector<8x128xf32>
    %c0_83 = arith.constant 0 : index
    %c0_84 = arith.constant 0 : index
    %97 = vector.load %arg9[%c0_83, %c0_84] : memref<8x128xf32, #tpu.memory_space<vmem>>, vector<8x128xf32>
    tpu.vector_store %arg9[%c0_83, %c0_84], %96 {strides = array<i32>} : memref<8x128xf32, #tpu.memory_space<vmem>>, vector<8x128xf32>,
    return
  }
}

</mosaic_0001>

<llo_original>
// kernel: tpu_custom_call.1
$region0: #{tpu_custom_call.1}
  #allocation0 [shape = 'u32[]', space=smem, size = 0x4, offset = 0x4, fixed_abs, tag = 'smem constant byte address 0x4 - core index']
  #allocation1 [shape = 'u32[72,128]{1,0:T(1,128)}', space=vmem, size = 0x9000, scoped, tag = 'internal scratch']
  #allocation2 [shape = 'f32[64,128]{1,0:T(8,128)}', space=vmem, size = 0x8000, scoped, tag = 'scratch operand']
  %s0 = inlined_call_operand.vmem [shape: f32[64,1], index: 0, kind: input, shape index: {}]
  %s1 = inlined_call_operand.vmem [shape: f32[1,128], index: 1, kind: input, shape index: {}]
  %s2 = inlined_call_operand.vmem [shape: f32[1,128], index: 2, kind: input, shape index: {}]
  %s3 = inlined_call_operand.hbm [shape: f32[128,128], index: 3, kind: input, shape index: {}]
  %s4 = inlined_call_operand.hbm [shape: f32[128,128], index: 4, kind: input, shape index: {}]
  %s5 = inlined_call_operand.vmem [shape: f32[1,128], index: 5, kind: input, shape index: {}]
  %s6 = inlined_call_operand.hbm [shape: f32[128,128], index: 6, kind: input, shape index: {}]
  %s7 = inlined_call_operand.hbm [shape: f32[128,128], index: 7, kind: input, shape index: {}]
  %s8 = inlined_call_operand.vmem [shape: f32[1,128], index: 8, kind: input, shape index: {}]
  %s9 = inlined_call_operand.hbm [shape: f32[8,128], index: 9, kind: output, shape index: {}]
  %s10 = sld [smem:[#allocation0]]
  $region62: #{tpu_custom_call.1} parent=0
    _
  %s12 = ssub.s32 1, %s10
  %s13 = scalar_select 0, %s12, %s10
  $region1: #{tpu_custom_call.1} parent=0
    #allocation3 [shape = 'u8[65536]{0}', space=vmem, size = 0x10000, scoped, tag = 'input window, operand 3, single buffered']
    #allocation4 [shape = 's32[1]{0}', space=sflag, size = 0x4, scoped, tag = 'scoped memory for tpu_custom_call.1']
    #allocation5 [shape = 's32[1]{0}', space=sflag, size = 0x4, scoped, tag = 'scoped memory for tpu_custom_call.1']
    #allocation6 [shape = 'u8[65536]{0}', space=vmem, size = 0x10000, scoped, tag = 'input window, operand 4, single buffered']
    #allocation7 [shape = 's32[1]{0}', space=sflag, size = 0x4, scoped, tag = 'scoped memory for tpu_custom_call.1']
    #allocation8 [shape = 'u8[65536]{0}', space=vmem, size = 0x10000, scoped, tag = 'input window, operand 6, single buffered']
    #allocation9 [shape = 'u8[65536]{0}', space=vmem, size = 0x10000, scoped, tag = 'input window, operand 7, single buffered']
    #allocation10 [shape = 's32[1]{0}', space=sflag, size = 0x4, scoped, tag = 'scoped memory for tpu_custom_call.1']
    #allocation11 [shape = 'u8[4096]{0}', space=vmem, size = 0x1000, scoped, tag = 'output window, operand 0, single buffered']
    %14 = vsyncpa [#allocation4], 0
    %15 = vsyncpa [#allocation7], 0
    %16 = vsyncpa [#allocation10], 0
    %17 = vsyncpa [#allocation5], 0
    // Predicated region
    $region2: #{tpu_custom_call.1} parent=1 // pred_check
      _
    $region3: #{tpu_custom_call.1} parent=1 // pred_check_branch
      %19 = sbr.rel (0) target = $region5
    $region4: #{tpu_custom_call.1} parent=1 // pred_region
      _
    $region5: #{tpu_custom_call.1} parent=1 // pred_fallthru
      _
    // Predicated region
    $region6: #{tpu_custom_call.1} parent=1 // pred_check
      _
    $region7: #{tpu_custom_call.1} parent=1 // pred_check_branch
      %21 = sbr.rel (0) target = $region9
    $region8: #{tpu_custom_call.1} parent=1 // pred_region
      _
    $region9: #{tpu_custom_call.1} parent=1 // pred_fallthru
      _
    // Predicated region
    $region10: #{tpu_custom_call.1} parent=1 // pred_check
      _
    $region11: #{tpu_custom_call.1} parent=1 // pred_check_branch
      %23 = sbr.rel (0) target = $region13
    $region12: #{tpu_custom_call.1} parent=1 // pred_region
      _
    $region13: #{tpu_custom_call.1} parent=1 // pred_fallthru
      _
    // Predicated region
    $region14: #{tpu_custom_call.1} parent=1 // pred_check
      _
    $region15: #{tpu_custom_call.1} parent=1 // pred_check_branch
      %25 = sbr.rel (0) target = $region17
    $region16: #{tpu_custom_call.1} parent=1 // pred_region
      %27 = vsyncadd [#allocation4], 0
      %s28 = sshll.u32 %s3, 4
      %s29 = int_to_ptr.hbm [resolvable:$true] %s28
      %s30 = sshll.u32 [#allocation3], 4
      %s31 = int_to_ptr.vmem [resolvable:$true] %s30
      %36 = dma.hbm_to_vmem [thread:$0]  %s29, 2048, %s31, [#allocation4], 128, 128, 8
    $region17: #{tpu_custom_call.1} parent=1 // pred_fallthru
      _
    // Predicated region
    $region18: #{tpu_custom_call.1} parent=1 // pred_check
      _
    $region19: #{tpu_custom_call.1} parent=1 // pred_check_branch
      %38 = sbr.rel (0) target = $region21
    $region20: #{tpu_custom_call.1} parent=1 // pred_region
      %40 = vsyncadd [#allocation7], 0
      %s41 = sshll.u32 %s4, 4
      %s42 = int_to_ptr.hbm [resolvable:$true] %s41
      %s43 = sshll.u32 [#allocation6], 4
      %s44 = int_to_ptr.vmem [resolvable:$true] %s43
      %49 = dma.hbm_to_vmem [thread:$0]  %s42, 2048, %s44, [#allocation7], 128, 128, 8
    $region21: #{tpu_custom_call.1} parent=1 // pred_fallthru
      _
    // Predicated region
    $region22: #{tpu_custom_call.1} parent=1 // pred_check
      _
    $region23: #{tpu_custom_call.1} parent=1 // pred_check_branch
      %51 = sbr.rel (0) target = $region25
    $region24: #{tpu_custom_call.1} parent=1 // pred_region
      _
    $region25: #{tpu_custom_call.1} parent=1 // pred_fallthru
      _
    // Predicated region
    $region26: #{tpu_custom_call.1} parent=1 // pred_check
      _
    $region27: #{tpu_custom_call.1} parent=1 // pred_check_branch
      %53 = sbr.rel (0) target = $region29
    $region28: #{tpu_custom_call.1} parent=1 // pred_region
      %55 = vsyncadd [#allocation7], 0
      %s56 = sshll.u32 %s6, 4
      %s57 = int_to_ptr.hbm [resolvable:$true] %s56
      %s58 = sshll.u32 [#allocation8], 4
      %s59 = int_to_ptr.vmem [resolvable:$true] %s58
      %64 = dma.hbm_to_vmem [thread:$0]  %s57, 2048, %s59, [#allocation7], 128, 128, 8
    $region29: #{tpu_custom_call.1} parent=1 // pred_fallthru
      _
    // Predicated region
    $region30: #{tpu_custom_call.1} parent=1 // pred_check
      _
    $region31: #{tpu_custom_call.1} parent=1 // pred_check_branch
      %66 = sbr.rel (0) target = $region33
    $region32: #{tpu_custom_call.1} parent=1 // pred_region
      %68 = vsyncadd [#allocation10], 0
      %s69 = sshll.u32 %s7, 4
      %s70 = int_to_ptr.hbm [resolvable:$true] %s69
      %s71 = sshll.u32 [#allocation9], 4
      %s72 = int_to_ptr.vmem [resolvable:$true] %s71
      %77 = dma.hbm_to_vmem [thread:$0]  %s70, 2048, %s72, [#allocation10], 128, 128, 8
    $region33: #{tpu_custom_call.1} parent=1 // pred_fallthru
      _
    // Predicated region
    $region34: #{tpu_custom_call.1} parent=1 // pred_check
      _
    $region35: #{tpu_custom_call.1} parent=1 // pred_check_branch
      %79 = sbr.rel (0) target = $region37
    $region36: #{tpu_custom_call.1} parent=1 // pred_region
      _
    $region37: #{tpu_custom_call.1} parent=1 // pred_fallthru
      _
    // Predicated region
    $region38: #{tpu_custom_call.1} parent=1 // pred_check
      _
    $region39: #{tpu_custom_call.1} parent=1 // pred_check_branch
      %81 = sbr.rel (0) target = $region41
    $region40: #{tpu_custom_call.1} parent=1 // pred_region
      %83 = dma.done [#allocation4], 2048
    $region41: #{tpu_custom_call.1} parent=1 // pred_fallthru
      _
    // Predicated region
    $region42: #{tpu_custom_call.1} parent=1 // pred_check
      _
    $region43: #{tpu_custom_call.1} parent=1 // pred_check_branch
      %85 = sbr.rel (0) target = $region45
    $region44: #{tpu_custom_call.1} parent=1 // pred_region
      %87 = dma.done [#allocation7], 2048
    $region45: #{tpu_custom_call.1} parent=1 // pred_fallthru
      _
    // Predicated region
    $region46: #{tpu_custom_call.1} parent=1 // pred_check
      _
    $region47: #{tpu_custom_call.1} parent=1 // pred_check_branch
      %89 = sbr.rel (0) target = $region49
    $region48: #{tpu_custom_call.1} parent=1 // pred_region
      %91 = dma.done [#allocation7], 2048
    $region49: #{tpu_custom_call.1} parent=1 // pred_fallthru
      _
    // Predicated region
    $region50: #{tpu_custom_call.1} parent=1 // pred_check
      _
    $region51: #{tpu_custom_call.1} parent=1 // pred_check_branch
      %93 = sbr.rel (0) target = $region53
    $region52: #{tpu_custom_call.1} parent=1 // pred_region
      %95 = dma.done [#allocation10], 2048
    $region53: #{tpu_custom_call.1} parent=1 // pred_fallthru
      _
    %v96 = vld [vmem:[%s0] sm:$0xff]
    %v97 = vld [vmem:[%s0 + $0x8] sm:$0xff]
    %v98 = vld [vmem:[%s0 + $0x10] sm:$0xff]
    %v99 = vld [vmem:[%s0 + $0x18] sm:$0xff]
    %v100 = vld [vmem:[%s0 + $0x20] sm:$0xff]
    %v101 = vld [vmem:[%s0 + $0x28] sm:$0xff]
    %v102 = vld [vmem:[%s0 + $0x30] sm:$0xff]
    %v103 = vld [vmem:[%s0 + $0x38] sm:$0xff]
    %v104 = vld [vmem:[%s1] sm:$0x1]
    %106 = vset.pattern.permute.xlu0 0
    %107 = vperm.xlu0 %106, %v96
    %v108 = vpop.permute.xlu0 %107
    %111 = vset.pattern.permute.xlu0 0
    %112 = vperm.xlu0 %111, %v97
    %v113 = vpop.permute.xlu0 %112
    %116 = vset.pattern.permute.xlu0 0
    %117 = vperm.xlu0 %116, %v98
    %v118 = vpop.permute.xlu0 %117
    %121 = vset.pattern.permute.xlu0 0
    %122 = vperm.xlu0 %121, %v99
    %v123 = vpop.permute.xlu0 %122
    %126 = vset.pattern.permute.xlu0 0
    %127 = vperm.xlu0 %126, %v100
    %v128 = vpop.permute.xlu0 %127
    %131 = vset.pattern.permute.xlu0 0
    %132 = vperm.xlu0 %131, %v101
    %v133 = vpop.permute.xlu0 %132
    %136 = vset.pattern.permute.xlu0 0
    %137 = vperm.xlu0 %136, %v102
    %v138 = vpop.permute.xlu0 %137
    %141 = vset.pattern.permute.xlu0 0
    %142 = vperm.xlu0 %141, %v103
    %v143 = vpop.permute.xlu0 %142
    %v146 = vperm.slane %v104, 0
    %v148 = vmul.f32 %v108, %v146
    %v149 = vmul.f32 %v113, %v146
    %v150 = vmul.f32 %v118, %v146
    %v151 = vmul.f32 %v123, %v146
    %v152 = vmul.f32 %v128, %v146
    %v153 = vmul.f32 %v133, %v146
    %v154 = vmul.f32 %v138, %v146
    %v155 = vmul.f32 %v143, %v146
    %v156 = vld [vmem:[%s2] sm:$0x1]
    %v158 = vperm.slane %v156, 0
    %v160 = vadd.f32 %v148, %v158
    %v161 = vadd.f32 %v149, %v158
    %v162 = vadd.f32 %v150, %v158
    %v163 = vadd.f32 %v151, %v158
    %v164 = vadd.f32 %v152, %v158
    %v165 = vadd.f32 %v153, %v158
    %v166 = vadd.f32 %v154, %v158
    %v167 = vadd.f32 %v155, %v158
    %168 = vst [vmem:[#allocation2] sm:$0xff] %v160
    %169 = vst [vmem:[#allocation2 + $0x8] sm:$0xff] %v161
    %170 = vst [vmem:[#allocation2 + $0x10] sm:$0xff] %v162
    %171 = vst [vmem:[#allocation2 + $0x18] sm:$0xff] %v163
    %172 = vst [vmem:[#allocation2 + $0x20] sm:$0xff] %v164
    %173 = vst [vmem:[#allocation2 + $0x28] sm:$0xff] %v165
    %174 = vst [vmem:[#allocation2 + $0x30] sm:$0xff] %v166
    %175 = vst [vmem:[#allocation2 + $0x38] sm:$0xff] %v167
    %v176 = vld [vmem:[#allocation3] sm:$0xff]
    %v177 = vld [vmem:[#allocation3 + $0x8] sm:$0xff]
    %v178 = vld [vmem:[#allocation3 + $0x10] sm:$0xff]
    %v179 = vld [vmem:[#allocation3 + $0x18] sm:$0xff]
    %v180 = vld [vmem:[#allocation3 + $0x20] sm:$0xff]
    %v181 = vld [vmem:[#allocation3 + $0x28] sm:$0xff]
    %v182 = vld [vmem:[#allocation3 + $0x30] sm:$0xff]
    %v183 = vld [vmem:[#allocation3 + $0x38] sm:$0xff]
    %v184 = vld [vmem:[#allocation3 + $0x40] sm:$0xff]
    %v185 = vld [vmem:[#allocation3 + $0x48] sm:$0xff]
    %v186 = vld [vmem:[#allocation3 + $0x50] sm:$0xff]
    %v187 = vld [vmem:[#allocation3 + $0x58] sm:$0xff]
    %v188 = vld [vmem:[#allocation3 + $0x60] sm:$0xff]
    %v189 = vld [vmem:[#allocation3 + $0x68] sm:$0xff]
    %v190 = vld [vmem:[#allocation3 + $0x70] sm:$0xff]
    %v191 = vld [vmem:[#allocation3 + $0x78] sm:$0xff]
    %v192 = vld [vmem:[#allocation2] sm:$0xff]
    %193 = vmatpush.msra.mxu0 %v191
    %194 = vmatpush.msra.mxu0 %v190
    %195 = vmatpush.msra.mxu0 %v189
    %196 = vmatpush.msra.mxu0 %v188
    %197 = vmatpush.msra.mxu0 %v187
    %198 = vmatpush.msra.mxu0 %v186
    %199 = vmatpush.msra.mxu0 %v185
    %200 = vmatpush.msra.mxu0 %v184
    %201 = vmatpush.msra.mxu0 %v183
    %202 = vmatpush.msra.mxu0 %v182
    %203 = vmatpush.msra.mxu0 %v181
    %204 = vmatpush.msra.mxu0 %v180
    %205 = vmatpush.msra.mxu0 %v179
    %206 = vmatpush.msra.mxu0 %v178
    %207 = vmatpush.msra.mxu0 %v177
    %208 = vmatpush.msra.mxu0 %v176
    %209 = vmatmul.f32.gmra.mxu0 0.0
    %v210 = vpop.f32.mrf.mxu0
    %v211 = vadd.f32 0.0, %v210
    %212 = vdwg.mxu0
    %v213 = vadd.f32 %v192, %v211
    %v214 = vtanh.pop %v213
    %215 = vst [vmem:[#allocation2] sm:$0xff] %v214
    %v216 = vld [vmem:[#allocation2 + $0x8] sm:$0xff]
    %217 = vmatpush.msra.mxu0 %v191
    %218 = vmatpush.msra.mxu0 %v190
    %219 = vmatpush.msra.mxu0 %v189
    %220 = vmatpush.msra.mxu0 %v188
    %221 = vmatpush.msra.mxu0 %v187
    %222 = vmatpush.msra.mxu0 %v186
    %223 = vmatpush.msra.mxu0 %v185
    %224 = vmatpush.msra.mxu0 %v184
    %225 = vmatpush.msra.mxu0 %v183
    %226 = vmatpush.msra.mxu0 %v182
    %227 = vmatpush.msra.mxu0 %v181
    %228 = vmatpush.msra.mxu0 %v180
    %229 = vmatpush.msra.mxu0 %v179
    %230 = vmatpush.msra.mxu0 %v178
    %231 = vmatpush.msra.mxu0 %v177
    %232 = vmatpush.msra.mxu0 %v176
    %233 = vmatmul.f32.gmra.mxu0 %v214
    %v234 = vpop.f32.mrf.mxu0
    %v235 = vadd.f32 0.0, %v234
    %236 = vdwg.mxu0
    %v237 = vadd.f32 %v216, %v235
    %v238 = vtanh.pop %v237
    %239 = vst [vmem:[#allocation2 + $0x8] sm:$0xff] %v238
    %v240 = vld [vmem:[#allocation2 + $0x10] sm:$0xff]
    %241 = vmatpush.msra.mxu0 %v191
    %242 = vmatpush.msra.mxu0 %v190
    %243 = vmatpush.msra.mxu0 %v189
    %244 = vmatpush.msra.mxu0 %v188
    %245 = vmatpush.msra.mxu0 %v187
    %246 = vmatpush.msra.mxu0 %v186
    %247 = vmatpush.msra.mxu0 %v185
    %248 = vmatpush.msra.mxu0 %v184
    %249 = vmatpush.msra.mxu0 %v183
    %250 = vmatpush.msra.mxu0 %v182
    %251 = vmatpush.msra.mxu0 %v181
    %252 = vmatpush.msra.mxu0 %v180
    %253 = vmatpush.msra.mxu0 %v179
    %254 = vmatpush.msra.mxu0 %v178
    %255 = vmatpush.msra.mxu0 %v177
    %256 = vmatpush.msra.mxu0 %v176
    %257 = vmatmul.f32.gmra.mxu0 %v238
    %v258 = vpop.f32.mrf.mxu0
    %v259 = vadd.f32 0.0, %v258
    %260 = vdwg.mxu0
    %v261 = vadd.f32 %v240, %v259
    %v262 = vtanh.pop %v261
    %263 = vst [vmem:[#allocation2 + $0x10] sm:$0xff] %v262
    %v264 = vld [vmem:[#allocation2 + $0x18] sm:$0xff]
    %265 = vmatpush.msra.mxu0 %v191
    %266 = vmatpush.msra.mxu0 %v190
    %267 = vmatpush.msra.mxu0 %v189
    %268 = vmatpush.msra.mxu0 %v188
    %269 = vmatpush.msra.mxu0 %v187
    %270 = vmatpush.msra.mxu0 %v186
    %271 = vmatpush.msra.mxu0 %v185
    %272 = vmatpush.msra.mxu0 %v184
    %273 = vmatpush.msra.mxu0 %v183
    %274 = vmatpush.msra.mxu0 %v182
    %275 = vmatpush.msra.mxu0 %v181
    %276 = vmatpush.msra.mxu0 %v180
    %277 = vmatpush.msra.mxu0 %v179
    %278 = vmatpush.msra.mxu0 %v178
    %279 = vmatpush.msra.mxu0 %v177
    %280 = vmatpush.msra.mxu0 %v176
    %281 = vmatmul.f32.gmra.mxu0 %v262
    %v282 = vpop.f32.mrf.mxu0
    %v283 = vadd.f32 0.0, %v282
    %284 = vdwg.mxu0
    %v285 = vadd.f32 %v264, %v283
    %v286 = vtanh.pop %v285
    %287 = vst [vmem:[#allocation2 + $0x18] sm:$0xff] %v286
    %v288 = vld [vmem:[#allocation2 + $0x20] sm:$0xff]
    %289 = vmatpush.msra.mxu0 %v191
    %290 = vmatpush.msra.mxu0 %v190
    %291 = vmatpush.msra.mxu0 %v189
    %292 = vmatpush.msra.mxu0 %v188
    %293 = vmatpush.msra.mxu0 %v187
    %294 = vmatpush.msra.mxu0 %v186
    %295 = vmatpush.msra.mxu0 %v185
    %296 = vmatpush.msra.mxu0 %v184
    %297 = vmatpush.msra.mxu0 %v183
    %298 = vmatpush.msra.mxu0 %v182
    %299 = vmatpush.msra.mxu0 %v181
    %300 = vmatpush.msra.mxu0 %v180
    %301 = vmatpush.msra.mxu0 %v179
    %302 = vmatpush.msra.mxu0 %v178
    %303 = vmatpush.msra.mxu0 %v177
    %304 = vmatpush.msra.mxu0 %v176
    %305 = vmatmul.f32.gmra.mxu0 %v286
    %v306 = vpop.f32.mrf.mxu0
    %v307 = vadd.f32 0.0, %v306
    %308 = vdwg.mxu0
    %v309 = vadd.f32 %v288, %v307
    %v310 = vtanh.pop %v309
    %311 = vst [vmem:[#allocation2 + $0x20] sm:$0xff] %v310
    %v312 = vld [vmem:[#allocation2 + $0x28] sm:$0xff]
    %313 = vmatpush.msra.mxu0 %v191
    %314 = vmatpush.msra.mxu0 %v190
    %315 = vmatpush.msra.mxu0 %v189
    %316 = vmatpush.msra.mxu0 %v188
    %317 = vmatpush.msra.mxu0 %v187
    %318 = vmatpush.msra.mxu0 %v186
    %319 = vmatpush.msra.mxu0 %v185
    %320 = vmatpush.msra.mxu0 %v184
    %321 = vmatpush.msra.mxu0 %v183
    %322 = vmatpush.msra.mxu0 %v182
    %323 = vmatpush.msra.mxu0 %v181
    %324 = vmatpush.msra.mxu0 %v180
    %325 = vmatpush.msra.mxu0 %v179
    %326 = vmatpush.msra.mxu0 %v178
    %327 = vmatpush.msra.mxu0 %v177
    %328 = vmatpush.msra.mxu0 %v176
    %329 = vmatmul.f32.gmra.mxu0 %v310
    %v330 = vpop.f32.mrf.mxu0
    %v331 = vadd.f32 0.0, %v330
    %332 = vdwg.mxu0
    %v333 = vadd.f32 %v312, %v331
    %v334 = vtanh.pop %v333
    %335 = vst [vmem:[#allocation2 + $0x28] sm:$0xff] %v334
    %v336 = vld [vmem:[#allocation2 + $0x30] sm:$0xff]
    %337 = vmatpush.msra.mxu0 %v191
    %338 = vmatpush.msra.mxu0 %v190
    %339 = vmatpush.msra.mxu0 %v189
    %340 = vmatpush.msra.mxu0 %v188
    %341 = vmatpush.msra.mxu0 %v187
    %342 = vmatpush.msra.mxu0 %v186
    %343 = vmatpush.msra.mxu0 %v185
    %344 = vmatpush.msra.mxu0 %v184
    %345 = vmatpush.msra.mxu0 %v183
    %346 = vmatpush.msra.mxu0 %v182
    %347 = vmatpush.msra.mxu0 %v181
    %348 = vmatpush.msra.mxu0 %v180
    %349 = vmatpush.msra.mxu0 %v179
    %350 = vmatpush.msra.mxu0 %v178
    %351 = vmatpush.msra.mxu0 %v177
    %352 = vmatpush.msra.mxu0 %v176
    %353 = vmatmul.f32.gmra.mxu0 %v334
    %v354 = vpop.f32.mrf.mxu0
    %v355 = vadd.f32 0.0, %v354
    %356 = vdwg.mxu0
    %v357 = vadd.f32 %v336, %v355
    %v358 = vtanh.pop %v357
    %359 = vst [vmem:[#allocation2 + $0x30] sm:$0xff] %v358
    %v360 = vld [vmem:[#allocation2 + $0x38] sm:$0xff]
    %361 = vmatpush.msra.mxu0 %v191
    %362 = vmatpush.msra.mxu0 %v190
    %363 = vmatpush.msra.mxu0 %v189
    %364 = vmatpush.msra.mxu0 %v188
    %365 = vmatpush.msra.mxu0 %v187
    %366 = vmatpush.msra.mxu0 %v186
    %367 = vmatpush.msra.mxu0 %v185
    %368 = vmatpush.msra.mxu0 %v184
    %369 = vmatpush.msra.mxu0 %v183
    %370 = vmatpush.msra.mxu0 %v182
    %371 = vmatpush.msra.mxu0 %v181
    %372 = vmatpush.msra.mxu0 %v180
    %373 = vmatpush.msra.mxu0 %v179
    %374 = vmatpush.msra.mxu0 %v178
    %375 = vmatpush.msra.mxu0 %v177
    %376 = vmatpush.msra.mxu0 %v176
    %377 = vmatmul.f32.gmra.mxu0 %v358
    %v378 = vpop.f32.mrf.mxu0
    %v379 = vadd.f32 0.0, %v378
    %380 = vdwg.mxu0
    %v381 = vadd.f32 %v360, %v379
    %v382 = vtanh.pop %v381
    %383 = vst [vmem:[#allocation2 + $0x38] sm:$0xff] %v382
    %v384 = vld [vmem:[#allocation2] sm:$0xff]
    %v385 = vld [vmem:[#allocation2 + $0x8] sm:$0xff]
    %v386 = vld [vmem:[#allocation2 + $0x10] sm:$0xff]
    %v387 = vld [vmem:[#allocation2 + $0x18] sm:$0xff]
    %v388 = vld [vmem:[#allocation2 + $0x20] sm:$0xff]
    %v389 = vld [vmem:[#allocation2 + $0x28] sm:$0xff]
    %v390 = vld [vmem:[#allocation2 + $0x30] sm:$0xff]
    %v391 = vld [vmem:[#allocation2 + $0x38] sm:$0xff]
    %v392 = vld [vmem:[#allocation6] sm:$0xff]
    %v393 = vld [vmem:[#allocation6 + $0x8] sm:$0xff]
    %v394 = vld [vmem:[#allocation6 + $0x10] sm:$0xff]
    %v395 = vld [vmem:[#allocation6 + $0x18] sm:$0xff]
    %v396 = vld [vmem:[#allocation6 + $0x20] sm:$0xff]
    %v397 = vld [vmem:[#allocation6 + $0x28] sm:$0xff]
    %v398 = vld [vmem:[#allocation6 + $0x30] sm:$0xff]
    %v399 = vld [vmem:[#allocation6 + $0x38] sm:$0xff]
    %v400 = vld [vmem:[#allocation6 + $0x40] sm:$0xff]
    %v401 = vld [vmem:[#allocation6 + $0x48] sm:$0xff]
    %v402 = vld [vmem:[#allocation6 + $0x50] sm:$0xff]
    %v403 = vld [vmem:[#allocation6 + $0x58] sm:$0xff]
    %v404 = vld [vmem:[#allocation6 + $0x60] sm:$0xff]
    %v405 = vld [vmem:[#allocation6 + $0x68] sm:$0xff]
    %v406 = vld [vmem:[#allocation6 + $0x70] sm:$0xff]
    %v407 = vld [vmem:[#allocation6 + $0x78] sm:$0xff]
    %v408 = vld [vmem:[%s5] sm:$0x1]
    %v410 = vperm.slane %v408, 0
    %412 = vmatpush.msra.mxu0 %v407
    %413 = vmatpush.msra.mxu0 %v406
    %414 = vmatpush.msra.mxu0 %v405
    %415 = vmatpush.msra.mxu0 %v404
    %416 = vmatpush.msra.mxu0 %v403
    %417 = vmatpush.msra.mxu0 %v402
    %418 = vmatpush.msra.mxu0 %v401
    %419 = vmatpush.msra.mxu0 %v400
    %420 = vmatpush.msra.mxu0 %v399
    %421 = vmatpush.msra.mxu0 %v398
    %422 = vmatpush.msra.mxu0 %v397
    %423 = vmatpush.msra.mxu0 %v396
    %424 = vmatpush.msra.mxu0 %v395
    %425 = vmatpush.msra.mxu0 %v394
    %426 = vmatpush.msra.mxu0 %v393
    %427 = vmatpush.msra.mxu0 %v392
    %428 = vmatmul.f32.gmra.mxu0 %v384
    %v429 = vpop.f32.mrf.mxu0
    %v430 = vadd.f32 %v410, %v429
    %431 = vmatmul.f32.gmra.mxu0 %v385
    %v432 = vpop.f32.mrf.mxu0
    %v433 = vadd.f32 %v410, %v432
    %434 = vmatmul.f32.gmra.mxu0 %v386
    %v435 = vpop.f32.mrf.mxu0
    %v436 = vadd.f32 %v410, %v435
    %437 = vmatmul.f32.gmra.mxu0 %v387
    %v438 = vpop.f32.mrf.mxu0
    %v439 = vadd.f32 %v410, %v438
    %440 = vmatmul.f32.gmra.mxu0 %v388
    %v441 = vpop.f32.mrf.mxu0
    %v442 = vadd.f32 %v410, %v441
    %443 = vmatmul.f32.gmra.mxu0 %v389
    %v444 = vpop.f32.mrf.mxu0
    %v445 = vadd.f32 %v410, %v444
    %446 = vmatmul.f32.gmra.mxu0 %v390
    %v447 = vpop.f32.mrf.mxu0
    %v448 = vadd.f32 %v410, %v447
    %449 = vmatmul.f32.gmra.mxu0 %v391
    %v450 = vpop.f32.mrf.mxu0
    %v451 = vadd.f32 %v410, %v450
    %452 = vdwg.mxu0
    %453 = vst [vmem:[#allocation2] sm:$0xff] %v430
    %454 = vst [vmem:[#allocation2 + $0x8] sm:$0xff] %v433
    %455 = vst [vmem:[#allocation2 + $0x10] sm:$0xff] %v436
    %456 = vst [vmem:[#allocation2 + $0x18] sm:$0xff] %v439
    %457 = vst [vmem:[#allocation2 + $0x20] sm:$0xff] %v442
    %458 = vst [vmem:[#allocation2 + $0x28] sm:$0xff] %v445
    %459 = vst [vmem:[#allocation2 + $0x30] sm:$0xff] %v448
    %460 = vst [vmem:[#allocation2 + $0x38] sm:$0xff] %v451
    %v461 = vld [vmem:[#allocation8] sm:$0xff]
    %v462 = vld [vmem:[#allocation8 + $0x8] sm:$0xff]
    %v463 = vld [vmem:[#allocation8 + $0x10] sm:$0xff]
    %v464 = vld [vmem:[#allocation8 + $0x18] sm:$0xff]
    %v465 = vld [vmem:[#allocation8 + $0x20] sm:$0xff]
    %v466 = vld [vmem:[#allocation8 + $0x28] sm:$0xff]
    %v467 = vld [vmem:[#allocation8 + $0x30] sm:$0xff]
    %v468 = vld [vmem:[#allocation8 + $0x38] sm:$0xff]
    %v469 = vld [vmem:[#allocation8 + $0x40] sm:$0xff]
    %v470 = vld [vmem:[#allocation8 + $0x48] sm:$0xff]
    %v471 = vld [vmem:[#allocation8 + $0x50] sm:$0xff]
    %v472 = vld [vmem:[#allocation8 + $0x58] sm:$0xff]
    %v473 = vld [vmem:[#allocation8 + $0x60] sm:$0xff]
    %v474 = vld [vmem:[#allocation8 + $0x68] sm:$0xff]
    %v475 = vld [vmem:[#allocation8 + $0x70] sm:$0xff]
    %v476 = vld [vmem:[#allocation8 + $0x78] sm:$0xff]
    %v477 = vld [vmem:[#allocation2] sm:$0xff]
    %478 = vmatpush.msra.mxu0 %v476
    %479 = vmatpush.msra.mxu0 %v475
    %480 = vmatpush.msra.mxu0 %v474
    %481 = vmatpush.msra.mxu0 %v473
    %482 = vmatpush.msra.mxu0 %v472
    %483 = vmatpush.msra.mxu0 %v471
    %484 = vmatpush.msra.mxu0 %v470
    %485 = vmatpush.msra.mxu0 %v469
    %486 = vmatpush.msra.mxu0 %v468
    %487 = vmatpush.msra.mxu0 %v467
    %488 = vmatpush.msra.mxu0 %v466
    %489 = vmatpush.msra.mxu0 %v465
    %490 = vmatpush.msra.mxu0 %v464
    %491 = vmatpush.msra.mxu0 %v463
    %492 = vmatpush.msra.mxu0 %v462
    %493 = vmatpush.msra.mxu0 %v461
    %494 = vmatmul.f32.gmra.mxu0 0.0
    %v495 = vpop.f32.mrf.mxu0
    %v496 = vadd.f32 0.0, %v495
    %497 = vdwg.mxu0
    %v498 = vadd.f32 %v477, %v496
    %v499 = vtanh.pop %v498
    %v500 = vld [vmem:[#allocation2 + $0x8] sm:$0xff]
    %501 = vmatpush.msra.mxu0 %v476
    %502 = vmatpush.msra.mxu0 %v475
    %503 = vmatpush.msra.mxu0 %v474
    %504 = vmatpush.msra.mxu0 %v473
    %505 = vmatpush.msra.mxu0 %v472
    %506 = vmatpush.msra.mxu0 %v471
    %507 = vmatpush.msra.mxu0 %v470
    %508 = vmatpush.msra.mxu0 %v469
    %509 = vmatpush.msra.mxu0 %v468
    %510 = vmatpush.msra.mxu0 %v467
    %511 = vmatpush.msra.mxu0 %v466
    %512 = vmatpush.msra.mxu0 %v465
    %513 = vmatpush.msra.mxu0 %v464
    %514 = vmatpush.msra.mxu0 %v463
    %515 = vmatpush.msra.mxu0 %v462
    %516 = vmatpush.msra.mxu0 %v461
    %517 = vmatmul.f32.gmra.mxu0 %v499
    %v518 = vpop.f32.mrf.mxu0
    %v519 = vadd.f32 0.0, %v518
    %520 = vdwg.mxu0
    %v521 = vadd.f32 %v500, %v519
    %v522 = vtanh.pop %v521
    %v523 = vld [vmem:[#allocation2 + $0x10] sm:$0xff]
    %524 = vmatpush.msra.mxu0 %v476
    %525 = vmatpush.msra.mxu0 %v475
    %526 = vmatpush.msra.mxu0 %v474
    %527 = vmatpush.msra.mxu0 %v473
    %528 = vmatpush.msra.mxu0 %v472
    %529 = vmatpush.msra.mxu0 %v471
    %530 = vmatpush.msra.mxu0 %v470
    %531 = vmatpush.msra.mxu0 %v469
    %532 = vmatpush.msra.mxu0 %v468
    %533 = vmatpush.msra.mxu0 %v467
    %534 = vmatpush.msra.mxu0 %v466
    %535 = vmatpush.msra.mxu0 %v465
    %536 = vmatpush.msra.mxu0 %v464
    %537 = vmatpush.msra.mxu0 %v463
    %538 = vmatpush.msra.mxu0 %v462
    %539 = vmatpush.msra.mxu0 %v461
    %540 = vmatmul.f32.gmra.mxu0 %v522
    %v541 = vpop.f32.mrf.mxu0
    %v542 = vadd.f32 0.0, %v541
    %543 = vdwg.mxu0
    %v544 = vadd.f32 %v523, %v542
    %v545 = vtanh.pop %v544
    %v546 = vld [vmem:[#allocation2 + $0x18] sm:$0xff]
    %547 = vmatpush.msra.mxu0 %v476
    %548 = vmatpush.msra.mxu0 %v475
    %549 = vmatpush.msra.mxu0 %v474
    %550 = vmatpush.msra.mxu0 %v473
    %551 = vmatpush.msra.mxu0 %v472
    %552 = vmatpush.msra.mxu0 %v471
    %553 = vmatpush.msra.mxu0 %v470
    %554 = vmatpush.msra.mxu0 %v469
    %555 = vmatpush.msra.mxu0 %v468
    %556 = vmatpush.msra.mxu0 %v467
    %557 = vmatpush.msra.mxu0 %v466
    %558 = vmatpush.msra.mxu0 %v465
    %559 = vmatpush.msra.mxu0 %v464
    %560 = vmatpush.msra.mxu0 %v463
    %561 = vmatpush.msra.mxu0 %v462
    %562 = vmatpush.msra.mxu0 %v461
    %563 = vmatmul.f32.gmra.mxu0 %v545
    %v564 = vpop.f32.mrf.mxu0
    %v565 = vadd.f32 0.0, %v564
    %566 = vdwg.mxu0
    %v567 = vadd.f32 %v546, %v565
    %v568 = vtanh.pop %v567
    %v569 = vld [vmem:[#allocation2 + $0x20] sm:$0xff]
    %570 = vmatpush.msra.mxu0 %v476
    %571 = vmatpush.msra.mxu0 %v475
    %572 = vmatpush.msra.mxu0 %v474
    %573 = vmatpush.msra.mxu0 %v473
    %574 = vmatpush.msra.mxu0 %v472
    %575 = vmatpush.msra.mxu0 %v471
    %576 = vmatpush.msra.mxu0 %v470
    %577 = vmatpush.msra.mxu0 %v469
    %578 = vmatpush.msra.mxu0 %v468
    %579 = vmatpush.msra.mxu0 %v467
    %580 = vmatpush.msra.mxu0 %v466
    %581 = vmatpush.msra.mxu0 %v465
    %582 = vmatpush.msra.mxu0 %v464
    %583 = vmatpush.msra.mxu0 %v463
    %584 = vmatpush.msra.mxu0 %v462
    %585 = vmatpush.msra.mxu0 %v461
    %586 = vmatmul.f32.gmra.mxu0 %v568
    %v587 = vpop.f32.mrf.mxu0
    %v588 = vadd.f32 0.0, %v587
    %589 = vdwg.mxu0
    %v590 = vadd.f32 %v569, %v588
    %v591 = vtanh.pop %v590
    %v592 = vld [vmem:[#allocation2 + $0x28] sm:$0xff]
    %593 = vmatpush.msra.mxu0 %v476
    %594 = vmatpush.msra.mxu0 %v475
    %595 = vmatpush.msra.mxu0 %v474
    %596 = vmatpush.msra.mxu0 %v473
    %597 = vmatpush.msra.mxu0 %v472
    %598 = vmatpush.msra.mxu0 %v471
    %599 = vmatpush.msra.mxu0 %v470
    %600 = vmatpush.msra.mxu0 %v469
    %601 = vmatpush.msra.mxu0 %v468
    %602 = vmatpush.msra.mxu0 %v467
    %603 = vmatpush.msra.mxu0 %v466
    %604 = vmatpush.msra.mxu0 %v465
    %605 = vmatpush.msra.mxu0 %v464
    %606 = vmatpush.msra.mxu0 %v463
    %607 = vmatpush.msra.mxu0 %v462
    %608 = vmatpush.msra.mxu0 %v461
    %609 = vmatmul.f32.gmra.mxu0 %v591
    %v610 = vpop.f32.mrf.mxu0
    %v611 = vadd.f32 0.0, %v610
    %612 = vdwg.mxu0
    %v613 = vadd.f32 %v592, %v611
    %v614 = vtanh.pop %v613
    %v615 = vld [vmem:[#allocation2 + $0x30] sm:$0xff]
    %616 = vmatpush.msra.mxu0 %v476
    %617 = vmatpush.msra.mxu0 %v475
    %618 = vmatpush.msra.mxu0 %v474
    %619 = vmatpush.msra.mxu0 %v473
    %620 = vmatpush.msra.mxu0 %v472
    %621 = vmatpush.msra.mxu0 %v471
    %622 = vmatpush.msra.mxu0 %v470
    %623 = vmatpush.msra.mxu0 %v469
    %624 = vmatpush.msra.mxu0 %v468
    %625 = vmatpush.msra.mxu0 %v467
    %626 = vmatpush.msra.mxu0 %v466
    %627 = vmatpush.msra.mxu0 %v465
    %628 = vmatpush.msra.mxu0 %v464
    %629 = vmatpush.msra.mxu0 %v463
    %630 = vmatpush.msra.mxu0 %v462
    %631 = vmatpush.msra.mxu0 %v461
    %632 = vmatmul.f32.gmra.mxu0 %v614
    %v633 = vpop.f32.mrf.mxu0
    %v634 = vadd.f32 0.0, %v633
    %635 = vdwg.mxu0
    %v636 = vadd.f32 %v615, %v634
    %v637 = vtanh.pop %v636
    %v638 = vld [vmem:[#allocation2 + $0x38] sm:$0xff]
    %639 = vmatpush.msra.mxu0 %v476
    %640 = vmatpush.msra.mxu0 %v475
    %641 = vmatpush.msra.mxu0 %v474
    %642 = vmatpush.msra.mxu0 %v473
    %643 = vmatpush.msra.mxu0 %v472
    %644 = vmatpush.msra.mxu0 %v471
    %645 = vmatpush.msra.mxu0 %v470
    %646 = vmatpush.msra.mxu0 %v469
    %647 = vmatpush.msra.mxu0 %v468
    %648 = vmatpush.msra.mxu0 %v467
    %649 = vmatpush.msra.mxu0 %v466
    %650 = vmatpush.msra.mxu0 %v465
    %651 = vmatpush.msra.mxu0 %v464
    %652 = vmatpush.msra.mxu0 %v463
    %653 = vmatpush.msra.mxu0 %v462
    %654 = vmatpush.msra.mxu0 %v461
    %655 = vmatmul.f32.gmra.mxu0 %v637
    %v656 = vpop.f32.mrf.mxu0
    %v657 = vadd.f32 0.0, %v656
    %658 = vdwg.mxu0
    %v659 = vadd.f32 %v638, %v657
    %v660 = vtanh.pop %v659
    %v661 = vld [vmem:[#allocation9] sm:$0xff]
    %v662 = vld [vmem:[#allocation9 + $0x8] sm:$0xff]
    %v663 = vld [vmem:[#allocation9 + $0x10] sm:$0xff]
    %v664 = vld [vmem:[#allocation9 + $0x18] sm:$0xff]
    %v665 = vld [vmem:[#allocation9 + $0x20] sm:$0xff]
    %v666 = vld [vmem:[#allocation9 + $0x28] sm:$0xff]
    %v667 = vld [vmem:[#allocation9 + $0x30] sm:$0xff]
    %v668 = vld [vmem:[#allocation9 + $0x38] sm:$0xff]
    %v669 = vld [vmem:[#allocation9 + $0x40] sm:$0xff]
    %v670 = vld [vmem:[#allocation9 + $0x48] sm:$0xff]
    %v671 = vld [vmem:[#allocation9 + $0x50] sm:$0xff]
    %v672 = vld [vmem:[#allocation9 + $0x58] sm:$0xff]
    %v673 = vld [vmem:[#allocation9 + $0x60] sm:$0xff]
    %v674 = vld [vmem:[#allocation9 + $0x68] sm:$0xff]
    %v675 = vld [vmem:[#allocation9 + $0x70] sm:$0xff]
    %v676 = vld [vmem:[#allocation9 + $0x78] sm:$0xff]
    %v677 = vld [vmem:[%s8] sm:$0x1]
    %v679 = vperm.slane %v677, 0
    %681 = vmatpush.msra.mxu0 %v676
    %682 = vmatpush.msra.mxu0 %v675
    %683 = vmatpush.msra.mxu0 %v674
    %684 = vmatpush.msra.mxu0 %v673
    %685 = vmatpush.msra.mxu0 %v672
    %686 = vmatpush.msra.mxu0 %v671
    %687 = vmatpush.msra.mxu0 %v670
    %688 = vmatpush.msra.mxu0 %v669
    %689 = vmatpush.msra.mxu0 %v668
    %690 = vmatpush.msra.mxu0 %v667
    %691 = vmatpush.msra.mxu0 %v666
    %692 = vmatpush.msra.mxu0 %v665
    %693 = vmatpush.msra.mxu0 %v664
    %694 = vmatpush.msra.mxu0 %v663
    %695 = vmatpush.msra.mxu0 %v662
    %696 = vmatpush.msra.mxu0 %v661
    %697 = vmatmul.f32.gmra.mxu0 %v660
    %v698 = vpop.f32.mrf.mxu0
    %v699 = vadd.f32 %v679, %v698
    %700 = vdwg.mxu0
    %701 = vst [vmem:[#allocation11] sm:$0xff] %v699
    // Predicated region
    $region54: #{tpu_custom_call.1} parent=1 // pred_check
      _
    $region55: #{tpu_custom_call.1} parent=1 // pred_check_branch
      %703 = sbr.rel (0) target = $region57
    $region56: #{tpu_custom_call.1} parent=1 // pred_region
      %705 = vsyncadd [#allocation5], 0
      %s707 = sshll.u32 [#allocation11], 4
      %s708 = int_to_ptr.vmem [resolvable:$true] %s707
      %s709 = sshll.u32 %s9, 4
      %s710 = int_to_ptr.hbm [resolvable:$true] %s709
      %712 = dma.vmem_to_hbm [thread:$0]  %s708, 128, %s710, [#allocation5]
    $region57: #{tpu_custom_call.1} parent=1 // pred_fallthru
      _
    // Predicated region
    $region58: #{tpu_custom_call.1} parent=1 // pred_check
      _
    $region59: #{tpu_custom_call.1} parent=1 // pred_check_branch
      %714 = sbr.rel (0) target = $region61
    $region60: #{tpu_custom_call.1} parent=1 // pred_region
      %716 = dma.done [#allocation5], 128
    $region61: #{tpu_custom_call.1} parent=1 // pred_fallthru
      _
    %717 = vsyncpa [#allocation4], 1
    %718 = vsyncpa [#allocation7], 1
    %719 = vsyncpa [#allocation10], 1
    %720 = vsyncpa [#allocation5], 1

</llo_original>
